<compile_context>
chip_gen: v5e
topology: v5e:2x2
jax: 0.10.0
libtpu: 0.0.40
codegen_flags: <defaults>
</compile_context>

<pallas_src>
import functools

import jax
import jax.numpy as jnp
from jax.experimental import pallas as pl
from jax.experimental.pallas import tpu as pltpu

_LANES = 128
_SUBLANES = 16          # bf16 sublane packing
_ROW_TILE_MAX = 512     # slab rows per grid step (lane-dense path)
_T_TILE_MAX = 512       # T rows per grid step (fallback path)


def _round_up(n, m):
    return ((n + m - 1) // m) * m


def _make_flat_kernel(row_tile, pos_per_row):
    """Lane-dense kernel over the flattened (rows, 128) slab."""

    def kernel(tab_ref, out_ref):
        # tab_ref: (2, 128) f32 ; row 0 = within-row t offset (lane // half)
        #                         row 1 = inv_freq[lane % half]
        # out_ref: (2, row_tile, 128) bf16 ; [0] = cos, [1] = sin
        r = jax.lax.broadcasted_iota(jnp.int32, (row_tile, _LANES), 0)
        row = pl.program_id(0) * row_tile + r            # global slab row
        t = (row * pos_per_row).astype(jnp.float32) + tab_ref[0:1, :]
        freqs = t * tab_ref[1:2, :]
        out_ref[0] = jnp.cos(freqs).astype(jnp.bfloat16)
        out_ref[1] = jnp.sin(freqs).astype(jnp.bfloat16)

    return kernel


def _make_rowblock_kernel(t_tile, half):
    """Fallback kernel (half does not divide 128): tile T directly."""

    def kernel(invf_ref, out_ref):
        # invf_ref: (1, half) f32 ; out_ref: (2, t_tile, half) bf16
        t = (pl.program_id(0) * t_tile
             + jax.lax.broadcasted_iota(jnp.int32, (t_tile, half), 0)
             ).astype(jnp.float32)
        freqs = t * invf_ref[...]
        out_ref[0] = jnp.cos(freqs).astype(jnp.bfloat16)
        out_ref[1] = jnp.sin(freqs).astype(jnp.bfloat16)

    return kernel


@functools.lru_cache(maxsize=None)
def _rotary_tables(seq_len, dim, base):
    """Returns (cos, sin), each (1, seq_len, 1, half) bfloat16."""
    inv_freq = 1.0 / (base ** (jnp.arange(0, dim, 2, dtype=jnp.float32) / dim))
    half = int(inv_freq.shape[0])            # == len(arange(0, dim, 2))

    parallel = pltpu.CompilerParams(dimension_semantics=("parallel",))

    if half <= _LANES and _LANES % half == 0:
        # --- Lane-dense flattened path (covers all common head dims). ---
        pos_per_row = _LANES // half          # t positions packed per slab row
        total = seq_len * half
        rows = pl.cdiv(total, _LANES)
        row_tile = min(_ROW_TILE_MAX, _round_up(rows, _SUBLANES))
        rows_padded = _round_up(rows, row_tile)
        num_tiles = rows_padded // row_tile

        lane = jnp.arange(_LANES, dtype=jnp.int32)
        lane_tab = jnp.stack(
            [(lane // half).astype(jnp.float32),    # within-row t offset
             inv_freq[lane % half]],                # per-lane inv_freq
            axis=0)                                 # (2, 128) f32

        fused = pl.pallas_call(
            _make_flat_kernel(row_tile, pos_per_row),
            out_shape=jax.ShapeDtypeStruct((2, rows_padded, _LANES),
                                           jnp.bfloat16),
            grid=(num_tiles,),
            in_specs=[pl.BlockSpec((2, _LANES), lambda i: (0, 0))],
            out_specs=pl.BlockSpec((2, row_tile, _LANES),
                                   lambda i: (0, i, 0)),
            compiler_params=parallel,
        )(lane_tab)

        flat = fused.reshape(2, rows_padded * _LANES)[:, :total]
        cos = flat[0].reshape(seq_len, half)
        sin = flat[1].reshape(seq_len, half)
    else:
        # --- Fallback for unusual head dims (half does not divide 128). ---
        # Still lane-dense whenever half is itself a multiple of 128.
        t_tile = min(_T_TILE_MAX, _round_up(seq_len, _SUBLANES))
        t_pad = _round_up(seq_len, t_tile)
        num_tiles = t_pad // t_tile

        fused = pl.pallas_call(
            _make_rowblock_kernel(t_tile, half),
            out_shape=jax.ShapeDtypeStruct((2, t_pad, half), jnp.bfloat16),
            grid=(num_tiles,),
            in_specs=[pl.BlockSpec((1, half), lambda i: (0, 0))],
            out_specs=pl.BlockSpec((2, t_tile, half), lambda i: (0, i, 0)),
            compiler_params=parallel,
        )(inv_freq.reshape(1, half))

        cos = fused[0, :seq_len, :]
        sin = fused[1, :seq_len, :]

    return cos[None, :, None, :], sin[None, :, None, :]


class Rotary:
    """JAX/Pallas equivalent of the PyTorch Rotary module (with caching)."""

    def __init__(self, dim, base=10000.0):
        self.dim = int(dim)
        self.base = float(base)
        self.seq_len_cached = None
        self.cos_cached = None
        self.sin_cached = None

    def __call__(self, x):
        seq_len = x.shape[1]
        if seq_len != self.seq_len_cached:
            self.seq_len_cached = seq_len
            self.cos_cached, self.sin_cached = _rotary_tables(
                seq_len, self.dim, self.base)
        return self.cos_cached, self.sin_cached

    forward = __call__


def rotary_forward(x, dim, base=10000.0):
    """Functional form of Rotary(dim, base).forward(x) -> (cos, sin)."""
    return _rotary_tables(int(x.shape[1]), int(dim), float(base))


def _reference(seq_len, dim, base=10000.0):
    inv_freq = 1.0 / (base ** (jnp.arange(0, dim, 2, dtype=jnp.float32) / dim))
    t = jnp.arange(seq_len, dtype=jnp.float32)
    freqs = jnp.outer(t, inv_freq)
    cos = jnp.cos(freqs).astype(jnp.bfloat16)[None, :, None, :]
    sin = jnp.sin(freqs).astype(jnp.bfloat16)[None, :, None, :]
    return cos, sin


def _check(name, got, want):
    assert got.shape == want.shape, (name, got.shape, want.shape)
    assert got.dtype == jnp.bfloat16, (name, got.dtype)
    ok = jnp.allclose(got.astype(jnp.float32), want.astype(jnp.float32),
                      atol=2e-2, rtol=2e-2)
    assert bool(ok), f"{name} mismatch"


if __name__ == "__main__":
    key = jax.random.PRNGKey(0)

    # Small shapes consistent with the module: (batch, seq, heads, head_dim).
    B, T, H, D = 2, 8, 4, 32
    x = jax.random.normal(key, (B, T, H, D), dtype=jnp.float32)

    rot = Rotary(D)
    cos, sin = rot(x)
    cos = jax.block_until_ready(cos)
    sin = jax.block_until_ready(sin)
    cos_ref, sin_ref = _reference(T, D)
    _check("cos", cos, cos_ref)
    _check("sin", sin, sin_ref)

    # Second call with the same seq_len hits the cache (torch-module semantics).
    cos_again, _ = rot(x)
    assert cos_again is cos

    # Multi-tile lane-dense path (exercises the per-tile iota offset).
    T2, D2 = 8192, 64
    x2 = jnp.zeros((1, T2, 1, D2), dtype=jnp.float32)
    cos2, sin2 = rotary_forward(x2, D2)
    jax.block_until_ready(cos2)
    cos2_ref, sin2_ref = _reference(T2, D2)
    _check("cos_long", cos2, cos2_ref)
    _check("sin_long", sin2, sin2_ref)

    # Fallback path for a head dim whose half does not divide 128.
    T3, D3 = 10, 48
    x3 = jnp.zeros((1, T3, 1, D3), dtype=jnp.float32)
    cos3, sin3 = rotary_forward(x3, D3)
    jax.block_until_ready(cos3)
    cos3_ref, sin3_ref = _reference(T3, D3)
    _check("cos_odd", cos3, cos3_ref)
    _check("sin_odd", sin3, sin3_ref)

    print("KERNEL_OK")
</pallas_src>

<mosaic_0001>
module attributes {stable_mosaic.version = 11 : i64} {
  func.func @kernel(%arg0: i32, %arg1: memref<2x128xf32, #tpu.memory_space<vmem>>, %arg2: memref<2x16x128xbf16, #tpu.memory_space<vmem>>) attributes {dimension_semantics = [#tpu.dimension_semantics<parallel>], iteration_bounds = array<i64: 1>, scalar_prefetch = 0 : i64, scratch_operands = 0 : i64, tpu.core_type = #tpu.core_type<tc>, window_params = [{pipeline_mode = #tpu.pipeline_mode<synchronous>, transform_indices = @transform_0, window_bounds = array<i64: 2, 128>}, {transform_indices = @transform_1, window_bounds = array<i64: 2, 16, 128>}]} {
    %0 = tpu.iota {dimensions = array<i32: 0>} : vector<16x128xi32>
    %c16_i32 = arith.constant 16 : i32
    %1 = arith.muli %arg0, %c16_i32 : i32
    %2 = vector.broadcast %1 : i32 to vector<16x128xi32>
    %3 = arith.addi %2, %0 : vector<16x128xi32>
    %c8_i32 = arith.constant 8 : i32
    %4 = vector.broadcast %c8_i32 : i32 to vector<16x128xi32>
    %5 = arith.muli %3, %4 : vector<16x128xi32>
    %6 = arith.sitofp %5 : vector<16x128xi32> to vector<16x128xf32>
    %c0 = arith.constant 0 : index
    %c0_0 = arith.constant 0 : index
    %7 = vector.load %arg1[%c0, %c0_0] : memref<2x128xf32, #tpu.memory_space<vmem>>, vector<1x128xf32>
    %8 = vector.broadcast %7 : vector<1x128xf32> to vector<16x128xf32>
    %9 = arith.addf %6, %8 : vector<16x128xf32>
    %c1 = arith.constant 1 : index
    %c0_1 = arith.constant 0 : index
    %10 = vector.load %arg1[%c1, %c0_1] : memref<2x128xf32, #tpu.memory_space<vmem>>, vector<1x128xf32>
    %11 = vector.broadcast %10 : vector<1x128xf32> to vector<16x128xf32>
    %12 = arith.mulf %9, %11 : vector<16x128xf32>
    %13 = math.cos %12 : vector<16x128xf32>
    %14 = arith.truncf %13 : vector<16x128xf32> to vector<16x128xbf16>
    %c0_2 = arith.constant 0 : index
    %c0_3 = arith.constant 0 : index
    %c0_4 = arith.constant 0 : index
    %15 = vector.load %arg2[%c0_2, %c0_3, %c0_4] : memref<2x16x128xbf16, #tpu.memory_space<vmem>>, vector<1x16x128xbf16>
    %16 = vector.shape_cast %15 : vector<1x16x128xbf16> to vector<16x128xbf16>
    %17 = vector.shape_cast %14 : vector<16x128xbf16> to vector<1x16x128xbf16>
    tpu.vector_store %arg2[%c0_2, %c0_3, %c0_4], %17 {strides = array<i32>} : memref<2x16x128xbf16, #tpu.memory_space<vmem>>, vector<1x16x128xbf16>,
    %18 = math.sin %12 : vector<16x128xf32>
    %19 = arith.truncf %18 : vector<16x128xf32> to vector<16x128xbf16>
    %c1_5 = arith.constant 1 : index
    %c0_6 = arith.constant 0 : index
    %c0_7 = arith.constant 0 : index
    %20 = vector.load %arg2[%c1_5, %c0_6, %c0_7] : memref<2x16x128xbf16, #tpu.memory_space<vmem>>, vector<1x16x128xbf16>
    %21 = vector.shape_cast %20 : vector<1x16x128xbf16> to vector<16x128xbf16>
    %22 = vector.shape_cast %19 : vector<16x128xbf16> to vector<1x16x128xbf16>
    tpu.vector_store %arg2[%c1_5, %c0_6, %c0_7], %22 {strides = array<i32>} : memref<2x16x128xbf16, #tpu.memory_space<vmem>>, vector<1x16x128xbf16>,
    return
  }
  func.func @transform_0(%arg0: i32) -> (i32, i32) {
    %c0_i32 = arith.constant 0 : i32
    %c0_i32_0 = arith.constant 0 : i32
    %c0_i32_1 = arith.constant 0 : i32
    return %c0_i32, %c0_i32_0 : i32, i32
  }
  func.func @transform_1(%arg0: i32) -> (i32, i32, i32) {
    %c0_i32 = arith.constant 0 : i32
    %c0_i32_0 = arith.constant 0 : i32
    %c0_i32_1 = arith.constant 0 : i32
    return %c0_i32, %arg0, %c0_i32_0 : i32, i32, i32
  }
}

</mosaic_0001>

<llo_original>
// kernel: tpu_custom_call.1
$region0: #{tpu_custom_call.1}
  #allocation0 [shape = 'u32[]', space=smem, size = 0x4, offset = 0x4, fixed_abs, tag = 'smem constant byte address 0x4 - core index']
  #allocation1 [shape = 'u32[72,128]{1,0:T(1,128)}', space=vmem, size = 0x9000, scoped, tag = 'internal scratch']
  %s0 = inlined_call_operand.hbm [shape: f32[2,128], index: 0, kind: input, shape index: {}]
  %s1 = inlined_call_operand.hbm [shape: bf16[2,16,128], index: 1, kind: output, shape index: {}]
  %s2 = sld [smem:[#allocation0]]
  $region18: #{tpu_custom_call.1} parent=0
    _
  %s4 = ssub.s32 1, %s2
  %s5 = scalar_select 0, %s4, %s2
  $region1: #{tpu_custom_call.1} parent=0
    #allocation2 [shape = 'u8[1024]{0}', space=vmem, size = 0x400, scoped, tag = 'input window, operand 0, single buffered']
    #allocation3 [shape = 's32[1]{0}', space=sflag, size = 0x4, scoped, tag = 'scoped memory for tpu_custom_call.1']
    #allocation4 [shape = 's32[1]{0}', space=sflag, size = 0x4, scoped, tag = 'scoped memory for tpu_custom_call.1']
    #allocation5 [shape = 'u8[8192]{0}', space=vmem, size = 0x2000, scoped, tag = 'output window, operand 0, single buffered']
    %6 = vsyncpa [#allocation3], 0
    %7 = vsyncpa [#allocation4], 0
    // Predicated region
    $region2: #{tpu_custom_call.1} parent=1 // pred_check
      _
    $region3: #{tpu_custom_call.1} parent=1 // pred_check_branch
      %9 = sbr.rel (0) target = $region5
    $region4: #{tpu_custom_call.1} parent=1 // pred_region
      %11 = vsyncadd [#allocation3], 0
      %s13 = sshll.u32 %s0, 4
      %s14 = int_to_ptr.hbm [resolvable:$true] %s13
      %s15 = sshll.u32 [#allocation2], 4
      %s16 = int_to_ptr.vmem [resolvable:$true] %s15
      %18 = dma.hbm_to_vmem [thread:$0]  %s14, 32, %s16, [#allocation3]
    $region5: #{tpu_custom_call.1} parent=1 // pred_fallthru
      _
    // Predicated region
    $region6: #{tpu_custom_call.1} parent=1 // pred_check
      _
    $region7: #{tpu_custom_call.1} parent=1 // pred_check_branch
      %20 = sbr.rel (0) target = $region9
    $region8: #{tpu_custom_call.1} parent=1 // pred_region
      %22 = dma.done [#allocation3], 32
    $region9: #{tpu_custom_call.1} parent=1 // pred_fallthru
      _
    %v23 = vlaneseq
    %v24 = vshrl.u32 %v23, 7
    %v25 = vadd.s32 %v24, 8
    %s26 = smul.u32 0, 16
    %v27 = vstv %s26
    %v28 = vadd.s32 %v27, %v24
    %v29 = vadd.s32 %v27, %v25
    %v30 = vmul.u32 %v28, 8
    %v31 = vmul.u32 %v29, 8
    %v32 = vcvt.s32.f32 %v30
    %v33 = vcvt.s32.f32 %v31
    %v34 = vld [vmem:[#allocation2] sm:$0x1]
    %v35 = vperm.slane %v34, 0
    %v36 = vadd.f32 %v32, %v35
    %v37 = vadd.f32 %v33, %v35
    %v38 = vld [vmem:[#allocation2 + $0x1] sm:$0x1]
    %v39 = vperm.slane %v38, 0
    %v40 = vmul.f32 %v36, %v39
    %v41 = vmul.f32 %v37, %v39
    %v42 = vand.u32 2147483647, %v40
    %vm43 = vcmp.le.f32.partialorder %v42, 0.7853982
    %vm44 = vcmp.lt.s32.totalorder %v40, 0
    %v45 = vand.u32 %v40, 2139095040
    %v46 = vshrl.u32 %v45, 23
    %v47 = vsub.s32 %v46, 127
    %v48 = vand.u32 2147483647, %v40
    %v49 = vand.u32 %v48, 8388607
    %v50 = vor.u32 %v49, 8388608
    %v51 = vsub.s32 0, %v50
    %v52 = vadd.s32 %v47, 1
    %vm53 = vcmp.gt.s32.totalorder %v52, 0
    %v54 = vsel %vm53, %v52, 0
    %v55 = vshrl.u32 %v54, 5
    %v56 = vand.u32 %v54, 31
    %v57 = vsub.s32 32, %v56
    %v58 = vshrl.u32 683565275, %v57
    %v59 = vshll.u32 683565275, %v56
    %v60 = vshrl.u32 2475754826, %v57
    %v61 = vor.u32 %v59, %v60
    %v62 = vshll.u32 2475754826, %v56
    %v63 = vshrl.u32 2131351028, %v57
    %v64 = vor.u32 %v62, %v63
    %v65 = vshll.u32 2131351028, %v56
    %v66 = vshrl.u32 2102212464, %v57
    %v67 = vor.u32 %v65, %v66
    %v68 = vshll.u32 2102212464, %v56
    %v69 = vshrl.u32 920167782, %v57
    %v70 = vor.u32 %v68, %v69
    %v71 = vshll.u32 920167782, %v56
    %v72 = vshrl.u32 1326507024, %v57
    %v73 = vor.u32 %v71, %v72
    %vm74 = vcmp.lt.s32.totalorder %v55, 1
    %vm75 = vcmp.lt.s32.totalorder %v55, 2
    %vm76 = vcmp.lt.s32.totalorder %v55, 3
    %vm77 = vcmp.lt.s32.totalorder %v55, 4
    %v78 = vsel %vm74, %v58, %v61
    %v79 = vsel %vm77, %v67, 2102212464
    %v80 = vsel %vm76, %v64, %v79
    %v81 = vsel %vm75, %v78, %v80
    %v82 = vsel %vm74, %v61, %v64
    %v83 = vsel %vm77, %v70, 920167782
    %v84 = vsel %vm76, %v67, %v83
    %v85 = vsel %vm75, %v82, %v84
    %v86 = vsel %vm74, %v64, %v67
    %v87 = vsel %vm77, %v73, 1326507024
    %v88 = vsel %vm76, %v70, %v87
    %v89 = vsel %vm75, %v86, %v88
    %v90 = vshll.u32 %v50, 8
    %v91 = vand.u32 %v90, 65535
    %v92 = vshrl.u32 %v90, 16
    %v93 = vand.u32 %v89, 65535
    %v94 = vshrl.u32 %v89, 16
    %v95 = vmul.u32 %v91, %v93
    %v96 = vmul.u32 %v91, %v94
    %v97 = vmul.u32 %v92, %v93
    %v98 = vmul.u32 %v92, %v94
    %v99 = vshll.u32 %v96, 16
    %v100 = vshrl.u32 %v96, 16
    %v101 = vshll.u32 %v97, 16
    %v102 = vshrl.u32 %v97, 16
    %vm103 = vc.u32 %v95, %v99
    %v104 = vsel %vm103, 1, 0
    %v105 = vadd.s32 %v95, %v99
    %v106 = vadd.s32 %v98, %v104
    %vm107 = vc.u32 %v105, %v101
    %v108 = vsel %vm107, 1, 0
    %v109 = vadd.s32 %v105, %v101
    %v110 = vadd.s32 %v106, %v108
    %v111 = vadd.s32 %v110, %v100
    %v112 = vadd.s32 %v111, %v102
    %v113 = vand.u32 %v90, 65535
    %v114 = vshrl.u32 %v90, 16
    %v115 = vand.u32 %v85, 65535
    %v116 = vshrl.u32 %v85, 16
    %v117 = vmul.u32 %v113, %v115
    %v118 = vmul.u32 %v113, %v116
    %v119 = vmul.u32 %v114, %v115
    %v120 = vmul.u32 %v114, %v116
    %v121 = vshll.u32 %v118, 16
    %v122 = vshrl.u32 %v118, 16
    %v123 = vshll.u32 %v119, 16
    %v124 = vshrl.u32 %v119, 16
    %vm125 = vc.u32 %v117, %v121
    %v126 = vsel %vm125, 1, 0
    %v127 = vadd.s32 %v117, %v121
    %v128 = vadd.s32 %v120, %v126
    %vm129 = vc.u32 %v127, %v123
    %v130 = vsel %vm129, 1, 0
    %v131 = vadd.s32 %v127, %v123
    %v132 = vadd.s32 %v128, %v130
    %v133 = vadd.s32 %v132, %v122
    %v134 = vadd.s32 %v133, %v124
    %v135 = vmul.u32 %v90, %v81
    %v136 = vadd.s32 %v112, %v131
    %vm137 = vc.u32 %v112, %v131
    %v138 = vadd.s32 %v134, 1
    %v139 = vsel %vm137, %v138, %v134
    %v140 = vadd.s32 %v135, %v139
    %v141 = vadd.s32 %v140, 536870912
    %v142 = vshrl.u32 %v141, 30
    %v143 = vshll.u32 %v142, 30
    %v144 = vsub.s32 %v140, %v143
    %vm145 = vcmp.lt.s32.totalorder %v144, 0
    %v146 = vsub.s32 0, %v144
    %v147 = vsel %vm145, %v146, %v144
    %v148 = vclz %v147
    %v149 = vsub.s32 %v148, 2
    %vm150 = vcmp.gt.s32.totalorder 0, %v149
    %v151 = vsel %vm150, 0, %v149
    %v152 = vsub.s32 32, %v151
    %v153 = vshll.u32 %v144, %v151
    %v154 = vshrl.u32 %v136, %v152
    %v155 = vor.u32 %v153, %v154
    %v156 = vsub.s32 4294967266, %v151
    %v157 = vadd.s32 %v156, 127
    %v158 = vshll.u32 %v157, 23
    %v159 = vor.u32 4788187, %v158
    %v160 = vand.u32 2147483647, %v159
    %v162 = vcvt.s32.f32 %v155
    %v163 = vmul.f32 %v162, %v160
    %v164 = vxor.u32 %v163, 2147483648
    %v165 = vsel %vm44, %v164, %v163
    %v166 = vsub.s32 4, %v142
    %v167 = vsel %vm44, %v166, %v142
    %v168 = vsel %vm43, %v40, %v165
    %v169 = vsel %vm43, 0, %v167
    %v170 = vmul.f32 %v168, %v168
    %v171 = vmul.f32 %v170, -0.001358992
    %v172 = vadd.f32 %v171, 0.041655596
    %v173 = vmul.f32 %v170, %v172
    %v174 = vadd.f32 %v173, -0.4999988
    %v175 = vmul.f32 %v170, %v174
    %v176 = vadd.f32 1.0, %v175
    %v177 = vmul.f32 %v168, %v168
    %v178 = vmul.f32 %v177, -0.00019511016
    %v179 = vadd.f32 %v178, 0.008332121
    %v180 = vmul.f32 %v177, %v179
    %v181 = vadd.f32 %v180, -0.16666654
    %v182 = vmul.f32 %v177, %v181
    %v183 = vadd.f32 %v182, 1.0
    %v184 = vmul.f32 %v183, %v168
    %vm185 = vweird.f32 %v40
    %v186 = vand.u32 %v169, 3
    %vm187 = vcmp.lt.s32.totalorder %v186, 2
    %vm188 = vcmp.eq.s32.totalorder %v186, 0
    %v189 = vxor.u32 %v184, 2147483648
    %v190 = vsel %vm188, %v176, %v189
    %vm191 = vcmp.eq.s32.totalorder %v186, 2
    %v192 = vxor.u32 %v176, 2147483648
    %v193 = vsel %vm191, %v192, %v184
    %v194 = vsel %vm187, %v190, %v193
    %v195 = vsel %vm185, nan, %v194
    %v196 = vand.u32 2147483647, %v41
    %vm197 = vcmp.le.f32.partialorder %v196, 0.7853982
    %vm198 = vcmp.lt.s32.totalorder %v41, 0
    %v199 = vand.u32 %v41, 2139095040
    %v200 = vshrl.u32 %v199, 23
    %v201 = vsub.s32 %v200, 127
    %v202 = vand.u32 2147483647, %v41
    %v203 = vand.u32 %v202, 8388607
    %v204 = vor.u32 %v203, 8388608
    %v205 = vsub.s32 0, %v204
    %v206 = vadd.s32 %v201, 1
    %vm207 = vcmp.gt.s32.totalorder %v206, 0
    %v208 = vsel %vm207, %v206, 0
    %v209 = vshrl.u32 %v208, 5
    %v210 = vand.u32 %v208, 31
    %v211 = vsub.s32 32, %v210
    %v212 = vshrl.u32 683565275, %v211
    %v213 = vshll.u32 683565275, %v210
    %v214 = vshrl.u32 2475754826, %v211
    %v215 = vor.u32 %v213, %v214
    %v216 = vshll.u32 2475754826, %v210
    %v217 = vshrl.u32 2131351028, %v211
    %v218 = vor.u32 %v216, %v217
    %v219 = vshll.u32 2131351028, %v210
    %v220 = vshrl.u32 2102212464, %v211
    %v221 = vor.u32 %v219, %v220
    %v222 = vshll.u32 2102212464, %v210
    %v223 = vshrl.u32 920167782, %v211
    %v224 = vor.u32 %v222, %v223
    %v225 = vshll.u32 920167782, %v210
    %v226 = vshrl.u32 1326507024, %v211
    %v227 = vor.u32 %v225, %v226
    %vm228 = vcmp.lt.s32.totalorder %v209, 1
    %vm229 = vcmp.lt.s32.totalorder %v209, 2
    %vm230 = vcmp.lt.s32.totalorder %v209, 3
    %vm231 = vcmp.lt.s32.totalorder %v209, 4
    %v232 = vsel %vm228, %v212, %v215
    %v233 = vsel %vm231, %v221, 2102212464
    %v234 = vsel %vm230, %v218, %v233
    %v235 = vsel %vm229, %v232, %v234
    %v236 = vsel %vm228, %v215, %v218
    %v237 = vsel %vm231, %v224, 920167782
    %v238 = vsel %vm230, %v221, %v237
    %v239 = vsel %vm229, %v236, %v238
    %v240 = vsel %vm228, %v218, %v221
    %v241 = vsel %vm231, %v227, 1326507024
    %v242 = vsel %vm230, %v224, %v241
    %v243 = vsel %vm229, %v240, %v242
    %v244 = vshll.u32 %v204, 8
    %v245 = vand.u32 %v244, 65535
    %v246 = vshrl.u32 %v244, 16
    %v247 = vand.u32 %v243, 65535
    %v248 = vshrl.u32 %v243, 16
    %v249 = vmul.u32 %v245, %v247
    %v250 = vmul.u32 %v245, %v248
    %v251 = vmul.u32 %v246, %v247
    %v252 = vmul.u32 %v246, %v248
    %v253 = vshll.u32 %v250, 16
    %v254 = vshrl.u32 %v250, 16
    %v255 = vshll.u32 %v251, 16
    %v256 = vshrl.u32 %v251, 16
    %vm257 = vc.u32 %v249, %v253
    %v258 = vsel %vm257, 1, 0
    %v259 = vadd.s32 %v249, %v253
    %v260 = vadd.s32 %v252, %v258
    %vm261 = vc.u32 %v259, %v255
    %v262 = vsel %vm261, 1, 0
    %v263 = vadd.s32 %v259, %v255
    %v264 = vadd.s32 %v260, %v262
    %v265 = vadd.s32 %v264, %v254
    %v266 = vadd.s32 %v265, %v256
    %v267 = vand.u32 %v244, 65535
    %v268 = vshrl.u32 %v244, 16
    %v269 = vand.u32 %v239, 65535
    %v270 = vshrl.u32 %v239, 16
    %v271 = vmul.u32 %v267, %v269
    %v272 = vmul.u32 %v267, %v270
    %v273 = vmul.u32 %v268, %v269
    %v274 = vmul.u32 %v268, %v270
    %v275 = vshll.u32 %v272, 16
    %v276 = vshrl.u32 %v272, 16
    %v277 = vshll.u32 %v273, 16
    %v278 = vshrl.u32 %v273, 16
    %vm279 = vc.u32 %v271, %v275
    %v280 = vsel %vm279, 1, 0
    %v281 = vadd.s32 %v271, %v275
    %v282 = vadd.s32 %v274, %v280
    %vm283 = vc.u32 %v281, %v277
    %v284 = vsel %vm283, 1, 0
    %v285 = vadd.s32 %v281, %v277
    %v286 = vadd.s32 %v282, %v284
    %v287 = vadd.s32 %v286, %v276
    %v288 = vadd.s32 %v287, %v278
    %v289 = vmul.u32 %v244, %v235
    %v290 = vadd.s32 %v266, %v285
    %vm291 = vc.u32 %v266, %v285
    %v292 = vadd.s32 %v288, 1
    %v293 = vsel %vm291, %v292, %v288
    %v294 = vadd.s32 %v289, %v293
    %v295 = vadd.s32 %v294, 536870912
    %v296 = vshrl.u32 %v295, 30
    %v297 = vshll.u32 %v296, 30
    %v298 = vsub.s32 %v294, %v297
    %vm299 = vcmp.lt.s32.totalorder %v298, 0
    %v300 = vsub.s32 0, %v298
    %v301 = vsel %vm299, %v300, %v298
    %v302 = vclz %v301
    %v303 = vsub.s32 %v302, 2
    %vm304 = vcmp.gt.s32.totalorder 0, %v303
    %v305 = vsel %vm304, 0, %v303
    %v306 = vsub.s32 32, %v305
    %v307 = vshll.u32 %v298, %v305
    %v308 = vshrl.u32 %v290, %v306
    %v309 = vor.u32 %v307, %v308
    %v310 = vsub.s32 4294967266, %v305
    %v311 = vadd.s32 %v310, 127
    %v312 = vshll.u32 %v311, 23
    %v313 = vor.u32 4788187, %v312
    %v314 = vand.u32 2147483647, %v313
    %v316 = vcvt.s32.f32 %v309
    %v317 = vmul.f32 %v316, %v314
    %v318 = vxor.u32 %v317, 2147483648
    %v319 = vsel %vm198, %v318, %v317
    %v320 = vsub.s32 4, %v296
    %v321 = vsel %vm198, %v320, %v296
    %v322 = vsel %vm197, %v41, %v319
    %v323 = vsel %vm197, 0, %v321
    %v324 = vmul.f32 %v322, %v322
    %v325 = vmul.f32 %v324, -0.001358992
    %v326 = vadd.f32 %v325, 0.041655596
    %v327 = vmul.f32 %v324, %v326
    %v328 = vadd.f32 %v327, -0.4999988
    %v329 = vmul.f32 %v324, %v328
    %v330 = vadd.f32 1.0, %v329
    %v331 = vmul.f32 %v322, %v322
    %v332 = vmul.f32 %v331, -0.00019511016
    %v333 = vadd.f32 %v332, 0.008332121
    %v334 = vmul.f32 %v331, %v333
    %v335 = vadd.f32 %v334, -0.16666654
    %v336 = vmul.f32 %v331, %v335
    %v337 = vadd.f32 %v336, 1.0
    %v338 = vmul.f32 %v337, %v322
    %vm339 = vweird.f32 %v41
    %v340 = vand.u32 %v323, 3
    %vm341 = vcmp.lt.s32.totalorder %v340, 2
    %vm342 = vcmp.eq.s32.totalorder %v340, 0
    %v343 = vxor.u32 %v338, 2147483648
    %v344 = vsel %vm342, %v330, %v343
    %vm345 = vcmp.eq.s32.totalorder %v340, 2
    %v346 = vxor.u32 %v330, 2147483648
    %v347 = vsel %vm345, %v346, %v338
    %v348 = vsel %vm341, %v344, %v347
    %v349 = vsel %vm339, nan, %v348
    %v350 = vpack.c.bf16 %v195, %v195
    %v351 = vpack.c.bf16 %v349, %v349
    %352 = vst [vmem:[#allocation5] sm:$0xf] %v350
    %353 = vst [vmem:[#allocation5 + $0x4] sm:$0xf] %v351
    %v354 = vand.u32 2147483647, %v40
    %vm355 = vcmp.le.f32.partialorder %v354, 0.7853982
    %vm356 = vcmp.lt.s32.totalorder %v40, 0
    %v357 = vand.u32 %v40, 2139095040
    %v358 = vshrl.u32 %v357, 23
    %v359 = vsub.s32 %v358, 127
    %v360 = vand.u32 2147483647, %v40
    %v361 = vand.u32 %v360, 8388607
    %v362 = vor.u32 %v361, 8388608
    %v363 = vsub.s32 0, %v362
    %v364 = vadd.s32 %v359, 1
    %vm365 = vcmp.gt.s32.totalorder %v364, 0
    %v366 = vsel %vm365, %v364, 0
    %v367 = vshrl.u32 %v366, 5
    %v368 = vand.u32 %v366, 31
    %v369 = vsub.s32 32, %v368
    %v370 = vshrl.u32 683565275, %v369
    %v371 = vshll.u32 683565275, %v368
    %v372 = vshrl.u32 2475754826, %v369
    %v373 = vor.u32 %v371, %v372
    %v374 = vshll.u32 2475754826, %v368
    %v375 = vshrl.u32 2131351028, %v369
    %v376 = vor.u32 %v374, %v375
    %v377 = vshll.u32 2131351028, %v368
    %v378 = vshrl.u32 2102212464, %v369
    %v379 = vor.u32 %v377, %v378
    %v380 = vshll.u32 2102212464, %v368
    %v381 = vshrl.u32 920167782, %v369
    %v382 = vor.u32 %v380, %v381
    %v383 = vshll.u32 920167782, %v368
    %v384 = vshrl.u32 1326507024, %v369
    %v385 = vor.u32 %v383, %v384
    %vm386 = vcmp.lt.s32.totalorder %v367, 1
    %vm387 = vcmp.lt.s32.totalorder %v367, 2
    %vm388 = vcmp.lt.s32.totalorder %v367, 3
    %vm389 = vcmp.lt.s32.totalorder %v367, 4
    %v390 = vsel %vm386, %v370, %v373
    %v391 = vsel %vm389, %v379, 2102212464
    %v392 = vsel %vm388, %v376, %v391
    %v393 = vsel %vm387, %v390, %v392
    %v394 = vsel %vm386, %v373, %v376
    %v395 = vsel %vm389, %v382, 920167782
    %v396 = vsel %vm388, %v379, %v395
    %v397 = vsel %vm387, %v394, %v396
    %v398 = vsel %vm386, %v376, %v379
    %v399 = vsel %vm389, %v385, 1326507024
    %v400 = vsel %vm388, %v382, %v399
    %v401 = vsel %vm387, %v398, %v400
    %v402 = vshll.u32 %v362, 8
    %v403 = vand.u32 %v402, 65535
    %v404 = vshrl.u32 %v402, 16
    %v405 = vand.u32 %v401, 65535
    %v406 = vshrl.u32 %v401, 16
    %v407 = vmul.u32 %v403, %v405
    %v408 = vmul.u32 %v403, %v406
    %v409 = vmul.u32 %v404, %v405
    %v410 = vmul.u32 %v404, %v406
    %v411 = vshll.u32 %v408, 16
    %v412 = vshrl.u32 %v408, 16
    %v413 = vshll.u32 %v409, 16
    %v414 = vshrl.u32 %v409, 16
    %vm415 = vc.u32 %v407, %v411
    %v416 = vsel %vm415, 1, 0
    %v417 = vadd.s32 %v407, %v411
    %v418 = vadd.s32 %v410, %v416
    %vm419 = vc.u32 %v417, %v413
    %v420 = vsel %vm419, 1, 0
    %v421 = vadd.s32 %v417, %v413
    %v422 = vadd.s32 %v418, %v420
    %v423 = vadd.s32 %v422, %v412
    %v424 = vadd.s32 %v423, %v414
    %v425 = vand.u32 %v402, 65535
    %v426 = vshrl.u32 %v402, 16
    %v427 = vand.u32 %v397, 65535
    %v428 = vshrl.u32 %v397, 16
    %v429 = vmul.u32 %v425, %v427
    %v430 = vmul.u32 %v425, %v428
    %v431 = vmul.u32 %v426, %v427
    %v432 = vmul.u32 %v426, %v428
    %v433 = vshll.u32 %v430, 16
    %v434 = vshrl.u32 %v430, 16
    %v435 = vshll.u32 %v431, 16
    %v436 = vshrl.u32 %v431, 16
    %vm437 = vc.u32 %v429, %v433
    %v438 = vsel %vm437, 1, 0
    %v439 = vadd.s32 %v429, %v433
    %v440 = vadd.s32 %v432, %v438
    %vm441 = vc.u32 %v439, %v435
    %v442 = vsel %vm441, 1, 0
    %v443 = vadd.s32 %v439, %v435
    %v444 = vadd.s32 %v440, %v442
    %v445 = vadd.s32 %v444, %v434
    %v446 = vadd.s32 %v445, %v436
    %v447 = vmul.u32 %v402, %v393
    %v448 = vadd.s32 %v424, %v443
    %vm449 = vc.u32 %v424, %v443
    %v450 = vadd.s32 %v446, 1
    %v451 = vsel %vm449, %v450, %v446
    %v452 = vadd.s32 %v447, %v451
    %v453 = vadd.s32 %v452, 536870912
    %v454 = vshrl.u32 %v453, 30
    %v455 = vshll.u32 %v454, 30
    %v456 = vsub.s32 %v452, %v455
    %vm457 = vcmp.lt.s32.totalorder %v456, 0
    %v458 = vsub.s32 0, %v456
    %v459 = vsel %vm457, %v458, %v456
    %v460 = vclz %v459
    %v461 = vsub.s32 %v460, 2
    %vm462 = vcmp.gt.s32.totalorder 0, %v461
    %v463 = vsel %vm462, 0, %v461
    %v464 = vsub.s32 32, %v463
    %v465 = vshll.u32 %v456, %v463
    %v466 = vshrl.u32 %v448, %v464
    %v467 = vor.u32 %v465, %v466
    %v468 = vsub.s32 4294967266, %v463
    %v469 = vadd.s32 %v468, 127
    %v470 = vshll.u32 %v469, 23
    %v471 = vor.u32 4788187, %v470
    %v472 = vand.u32 2147483647, %v471
    %v474 = vcvt.s32.f32 %v467
    %v475 = vmul.f32 %v474, %v472
    %v476 = vxor.u32 %v475, 2147483648
    %v477 = vsel %vm356, %v476, %v475
    %v478 = vsub.s32 4, %v454
    %v479 = vsel %vm356, %v478, %v454
    %v480 = vsel %vm355, %v40, %v477
    %v481 = vsel %vm355, 0, %v479
    %v482 = vmul.f32 %v480, %v480
    %v483 = vmul.f32 %v482, -0.001358992
    %v484 = vadd.f32 %v483, 0.041655596
    %v485 = vmul.f32 %v482, %v484
    %v486 = vadd.f32 %v485, -0.4999988
    %v487 = vmul.f32 %v482, %v486
    %v488 = vadd.f32 1.0, %v487
    %v489 = vmul.f32 %v480, %v480
    %v490 = vmul.f32 %v489, -0.00019511016
    %v491 = vadd.f32 %v490, 0.008332121
    %v492 = vmul.f32 %v489, %v491
    %v493 = vadd.f32 %v492, -0.16666654
    %v494 = vmul.f32 %v489, %v493
    %v495 = vadd.f32 %v494, 1.0
    %v496 = vmul.f32 %v495, %v480
    %vm497 = vweird.f32 %v40
    %v498 = vadd.s32 %v481, 3
    %v499 = vand.u32 %v498, 3
    %vm500 = vcmp.lt.s32.totalorder %v499, 2
    %vm501 = vcmp.eq.s32.totalorder %v499, 0
    %v502 = vxor.u32 %v496, 2147483648
    %v503 = vsel %vm501, %v488, %v502
    %vm504 = vcmp.eq.s32.totalorder %v499, 2
    %v505 = vxor.u32 %v488, 2147483648
    %v506 = vsel %vm504, %v505, %v496
    %v507 = vsel %vm500, %v503, %v506
    %v508 = vsel %vm497, nan, %v507
    %v509 = vand.u32 2147483647, %v41
    %vm510 = vcmp.le.f32.partialorder %v509, 0.7853982
    %vm511 = vcmp.lt.s32.totalorder %v41, 0
    %v512 = vand.u32 %v41, 2139095040
    %v513 = vshrl.u32 %v512, 23
    %v514 = vsub.s32 %v513, 127
    %v515 = vand.u32 2147483647, %v41
    %v516 = vand.u32 %v515, 8388607
    %v517 = vor.u32 %v516, 8388608
    %v518 = vsub.s32 0, %v517
    %v519 = vadd.s32 %v514, 1
    %vm520 = vcmp.gt.s32.totalorder %v519, 0
    %v521 = vsel %vm520, %v519, 0
    %v522 = vshrl.u32 %v521, 5
    %v523 = vand.u32 %v521, 31
    %v524 = vsub.s32 32, %v523
    %v525 = vshrl.u32 683565275, %v524
    %v526 = vshll.u32 683565275, %v523
    %v527 = vshrl.u32 2475754826, %v524
    %v528 = vor.u32 %v526, %v527
    %v529 = vshll.u32 2475754826, %v523
    %v530 = vshrl.u32 2131351028, %v524
    %v531 = vor.u32 %v529, %v530
    %v532 = vshll.u32 2131351028, %v523
    %v533 = vshrl.u32 2102212464, %v524
    %v534 = vor.u32 %v532, %v533
    %v535 = vshll.u32 2102212464, %v523
    %v536 = vshrl.u32 920167782, %v524
    %v537 = vor.u32 %v535, %v536
    %v538 = vshll.u32 920167782, %v523
    %v539 = vshrl.u32 1326507024, %v524
    %v540 = vor.u32 %v538, %v539
    %vm541 = vcmp.lt.s32.totalorder %v522, 1
    %vm542 = vcmp.lt.s32.totalorder %v522, 2
    %vm543 = vcmp.lt.s32.totalorder %v522, 3
    %vm544 = vcmp.lt.s32.totalorder %v522, 4
    %v545 = vsel %vm541, %v525, %v528
    %v546 = vsel %vm544, %v534, 2102212464
    %v547 = vsel %vm543, %v531, %v546
    %v548 = vsel %vm542, %v545, %v547
    %v549 = vsel %vm541, %v528, %v531
    %v550 = vsel %vm544, %v537, 920167782
    %v551 = vsel %vm543, %v534, %v550
    %v552 = vsel %vm542, %v549, %v551
    %v553 = vsel %vm541, %v531, %v534
    %v554 = vsel %vm544, %v540, 1326507024
    %v555 = vsel %vm543, %v537, %v554
    %v556 = vsel %vm542, %v553, %v555
    %v557 = vshll.u32 %v517, 8
    %v558 = vand.u32 %v557, 65535
    %v559 = vshrl.u32 %v557, 16
    %v560 = vand.u32 %v556, 65535
    %v561 = vshrl.u32 %v556, 16
    %v562 = vmul.u32 %v558, %v560
    %v563 = vmul.u32 %v558, %v561
    %v564 = vmul.u32 %v559, %v560
    %v565 = vmul.u32 %v559, %v561
    %v566 = vshll.u32 %v563, 16
    %v567 = vshrl.u32 %v563, 16
    %v568 = vshll.u32 %v564, 16
    %v569 = vshrl.u32 %v564, 16
    %vm570 = vc.u32 %v562, %v566
    %v571 = vsel %vm570, 1, 0
    %v572 = vadd.s32 %v562, %v566
    %v573 = vadd.s32 %v565, %v571
    %vm574 = vc.u32 %v572, %v568
    %v575 = vsel %vm574, 1, 0
    %v576 = vadd.s32 %v572, %v568
    %v577 = vadd.s32 %v573, %v575
    %v578 = vadd.s32 %v577, %v567
    %v579 = vadd.s32 %v578, %v569
    %v580 = vand.u32 %v557, 65535
    %v581 = vshrl.u32 %v557, 16
    %v582 = vand.u32 %v552, 65535
    %v583 = vshrl.u32 %v552, 16
    %v584 = vmul.u32 %v580, %v582
    %v585 = vmul.u32 %v580, %v583
    %v586 = vmul.u32 %v581, %v582
    %v587 = vmul.u32 %v581, %v583
    %v588 = vshll.u32 %v585, 16
    %v589 = vshrl.u32 %v585, 16
    %v590 = vshll.u32 %v586, 16
    %v591 = vshrl.u32 %v586, 16
    %vm592 = vc.u32 %v584, %v588
    %v593 = vsel %vm592, 1, 0
    %v594 = vadd.s32 %v584, %v588
    %v595 = vadd.s32 %v587, %v593
    %vm596 = vc.u32 %v594, %v590
    %v597 = vsel %vm596, 1, 0
    %v598 = vadd.s32 %v594, %v590
    %v599 = vadd.s32 %v595, %v597
    %v600 = vadd.s32 %v599, %v589
    %v601 = vadd.s32 %v600, %v591
    %v602 = vmul.u32 %v557, %v548
    %v603 = vadd.s32 %v579, %v598
    %vm604 = vc.u32 %v579, %v598
    %v605 = vadd.s32 %v601, 1
    %v606 = vsel %vm604, %v605, %v601
    %v607 = vadd.s32 %v602, %v606
    %v608 = vadd.s32 %v607, 536870912
    %v609 = vshrl.u32 %v608, 30
    %v610 = vshll.u32 %v609, 30
    %v611 = vsub.s32 %v607, %v610
    %vm612 = vcmp.lt.s32.totalorder %v611, 0
    %v613 = vsub.s32 0, %v611
    %v614 = vsel %vm612, %v613, %v611
    %v615 = vclz %v614
    %v616 = vsub.s32 %v615, 2
    %vm617 = vcmp.gt.s32.totalorder 0, %v616
    %v618 = vsel %vm617, 0, %v616
    %v619 = vsub.s32 32, %v618
    %v620 = vshll.u32 %v611, %v618
    %v621 = vshrl.u32 %v603, %v619
    %v622 = vor.u32 %v620, %v621
    %v623 = vsub.s32 4294967266, %v618
    %v624 = vadd.s32 %v623, 127
    %v625 = vshll.u32 %v624, 23
    %v626 = vor.u32 4788187, %v625
    %v627 = vand.u32 2147483647, %v626
    %v629 = vcvt.s32.f32 %v622
    %v630 = vmul.f32 %v629, %v627
    %v631 = vxor.u32 %v630, 2147483648
    %v632 = vsel %vm511, %v631, %v630
    %v633 = vsub.s32 4, %v609
    %v634 = vsel %vm511, %v633, %v609
    %v635 = vsel %vm510, %v41, %v632
    %v636 = vsel %vm510, 0, %v634
    %v637 = vmul.f32 %v635, %v635
    %v638 = vmul.f32 %v637, -0.001358992
    %v639 = vadd.f32 %v638, 0.041655596
    %v640 = vmul.f32 %v637, %v639
    %v641 = vadd.f32 %v640, -0.4999988
    %v642 = vmul.f32 %v637, %v641
    %v643 = vadd.f32 1.0, %v642
    %v644 = vmul.f32 %v635, %v635
    %v645 = vmul.f32 %v644, -0.00019511016
    %v646 = vadd.f32 %v645, 0.008332121
    %v647 = vmul.f32 %v644, %v646
    %v648 = vadd.f32 %v647, -0.16666654
    %v649 = vmul.f32 %v644, %v648
    %v650 = vadd.f32 %v649, 1.0
    %v651 = vmul.f32 %v650, %v635
    %vm652 = vweird.f32 %v41
    %v653 = vadd.s32 %v636, 3
    %v654 = vand.u32 %v653, 3
    %vm655 = vcmp.lt.s32.totalorder %v654, 2
    %vm656 = vcmp.eq.s32.totalorder %v654, 0
    %v657 = vxor.u32 %v651, 2147483648
    %v658 = vsel %vm656, %v643, %v657
    %vm659 = vcmp.eq.s32.totalorder %v654, 2
    %v660 = vxor.u32 %v643, 2147483648
    %v661 = vsel %vm659, %v660, %v651
    %v662 = vsel %vm655, %v658, %v661
    %v663 = vsel %vm652, nan, %v662
    %v664 = vpack.c.bf16 %v508, %v508
    %v665 = vpack.c.bf16 %v663, %v663
    %s666 = scalar_lea.vmem [#allocation5], 8
    %667 = vst [vmem:[%s666] sm:$0xf] %v664
    %668 = vst [vmem:[%s666 + $0x4] sm:$0xf] %v665
    // Predicated region
    $region10: #{tpu_custom_call.1} parent=1 // pred_check
      _
    $region11: #{tpu_custom_call.1} parent=1 // pred_check_branch
      %670 = sbr.rel (0) target = $region13
    $region12: #{tpu_custom_call.1} parent=1 // pred_region
      %672 = vsyncadd [#allocation4], 0
      %s673 = sshll.u32 [#allocation5], 4
      %s674 = int_to_ptr.vmem [resolvable:$true] %s673
      %s675 = sshll.u32 %s1, 4
      %s676 = int_to_ptr.hbm [resolvable:$true] %s675
      %681 = dma.vmem_to_hbm [thread:$0]  %s674, 256, %s676, [#allocation4], 64, 64, 4
    $region13: #{tpu_custom_call.1} parent=1 // pred_fallthru
      _
    // Predicated region
    $region14: #{tpu_custom_call.1} parent=1 // pred_check
      _
    $region15: #{tpu_custom_call.1} parent=1 // pred_check_branch
      %683 = sbr.rel (0) target = $region17
    $region16: #{tpu_custom_call.1} parent=1 // pred_region
      %685 = dma.done [#allocation4], 256
    $region17: #{tpu_custom_call.1} parent=1 // pred_fallthru
      _
    %686 = vsyncpa [#allocation3], 1
    %687 = vsyncpa [#allocation4], 1

</llo_original>
